<compile_context>
chip_gen: v7x
topology: tpu7x:2x2x1
jax: 0.10.0
libtpu: 0.0.40
codegen_flags: <defaults>
</compile_context>

<pallas_src>
import functools

import jax
import jax.numpy as jnp
from jax import lax
from jax.experimental import pallas as pl
from jax.experimental.pallas import tpu as pltpu


def _linear_swish_scale_kernel(x_ref, w_ref, b_ref, o_ref, *, scaling_factor):
    # x_ref: (B, K)          -- full input, resident across the N grid
    # w_ref: (tn, K)         -- weight tile in native PyTorch (N, K) layout
    # b_ref: (1, tn)         -- bias tile
    # o_ref: (B, tn)
    z = lax.dot_general(
        x_ref[...],
        w_ref[...],
        dimension_numbers=(((1,), (1,)), ((), ())),  # contract K with K -> (B, tn)
        preferred_element_type=jnp.float32,
    )
    z = z + b_ref[...]                               # (B, tn) + (1, tn) broadcast
    swish = z * jax.nn.sigmoid(z)
    o_ref[...] = (swish * scaling_factor).astype(o_ref.dtype)


def linear_swish_scale(x, weight, bias, scaling_factor, *, tn=None):
    """x: (B, K), weight: (N, K) [PyTorch nn.Linear layout], bias: (N,)."""
    B, K = x.shape
    N, Kw = weight.shape
    assert K == Kw, "weight in_features mismatch"
    assert bias.shape == (N,), "bias shape mismatch"

    if tn is None:
        # Two lane-aligned N tiles (fills both v7x TensorCores) when possible,
        # otherwise a single full-array step.
        tn = N // 2 if (N % 2 == 0 and (N // 2) % 128 == 0) else N
    assert N % tn == 0 and (tn == N or tn % 128 == 0), "tn must be lane-aligned"

    kernel = functools.partial(
        _linear_swish_scale_kernel, scaling_factor=float(scaling_factor)
    )
    b2 = bias.reshape(1, N)

    return pl.pallas_call(
        kernel,
        out_shape=jax.ShapeDtypeStruct((B, N), x.dtype),
        grid=(N // tn,),
        in_specs=[
            pl.BlockSpec((B, K), lambda j: (0, 0)),    # whole x every step
            pl.BlockSpec((tn, K), lambda j: (j, 0)),   # weight tile, untransposed
            pl.BlockSpec((1, tn), lambda j: (0, j)),   # bias tile
        ],
        out_specs=pl.BlockSpec((B, tn), lambda j: (0, j)),
        compiler_params=pltpu.CompilerParams(
            dimension_semantics=("parallel",),
        ),
    )(x, weight, b2)


if __name__ == "__main__":
    in_features = 1024
    out_features = 512
    scaling_factor = 2.0
    batch = 8

    key = jax.random.PRNGKey(0)
    kx, kw, kb = jax.random.split(key, 3)

    # Deterministic parameter init (mimics nn.Linear's uniform(-1/sqrt(K), 1/sqrt(K)))
    bound = 1.0 / (in_features ** 0.5)
    x = jax.random.normal(kx, (batch, in_features), dtype=jnp.float32)
    weight = jax.random.uniform(
        kw, (out_features, in_features), jnp.float32, -bound, bound
    )
    bias = jax.random.uniform(kb, (out_features,), jnp.float32, -bound, bound)

    out = linear_swish_scale(x, weight, bias, scaling_factor)
    out = jax.block_until_ready(out)

    # Reference check in plain JAX
    z = x @ weight.T + bias
    ref = z * jax.nn.sigmoid(z) * scaling_factor
    assert out.shape == (batch, out_features)
    assert jnp.allclose(out, ref, atol=1e-5, rtol=1e-5), "mismatch vs reference"

    print("KERNEL_OK")
</pallas_src>

<mosaic_0001>
module attributes {stable_mosaic.version = 11 : i64} {
  func.func @_linear_swish_scale_kernel(%arg0: i32, %arg1: memref<8x1024xf32, #tpu.memory_space<vmem>>, %arg2: memref<256x1024xf32, #tpu.memory_space<vmem>>, %arg3: memref<1x256xf32, #tpu.memory_space<vmem>>, %arg4: memref<8x256xf32, #tpu.memory_space<vmem>>) attributes {dimension_semantics = [#tpu.dimension_semantics<parallel>], iteration_bounds = array<i64: 2>, scalar_prefetch = 0 : i64, scratch_operands = 0 : i64, tpu.core_type = #tpu.core_type<tc>, window_params = [{pipeline_mode = #tpu.pipeline_mode<synchronous>, transform_indices = @transform_0, window_bounds = array<i64: 8, 1024>}, {transform_indices = @transform_1, window_bounds = array<i64: 256, 1024>}, {transform_indices = @transform_2, window_bounds = array<i64: 1, 256>}, {transform_indices = @transform_3, window_bounds = array<i64: 8, 256>}]} {
    %c0 = arith.constant 0 : index
    %c0_0 = arith.constant 0 : index
    %0 = vector.load %arg1[%c0, %c0_0] : memref<8x1024xf32, #tpu.memory_space<vmem>>, vector<8x1024xf32>
    %c0_1 = arith.constant 0 : index
    %c0_2 = arith.constant 0 : index
    %1 = vector.load %arg2[%c0_1, %c0_2] : memref<256x1024xf32, #tpu.memory_space<vmem>>, vector<256x1024xf32>
    %cst = arith.constant dense<0.000000e+00> : vector<8x256xf32>
    %2 = tpu.matmul %0, %1, %cst {dimension_numbers = #tpu.dot_dimension_numbers<[1], [1], [0], [0], [0, 0, 1, 0], [], []>} : vector<8x1024xf32>, vector<256x1024xf32>, vector<8x256xf32> -> vector<8x256xf32>
    %c0_3 = arith.constant 0 : index
    %c0_4 = arith.constant 0 : index
    %3 = vector.load %arg3[%c0_3, %c0_4] : memref<1x256xf32, #tpu.memory_space<vmem>>, vector<1x256xf32>
    %4 = vector.broadcast %3 : vector<1x256xf32> to vector<8x256xf32>
    %5 = arith.addf %2, %4 : vector<8x256xf32>
    %6 = arith.negf %5 : vector<8x256xf32>
    %7 = math.exp %6 : vector<8x256xf32>
    %cst_5 = arith.constant 1.000000e+00 : f32
    %8 = vector.broadcast %cst_5 : f32 to vector<8x256xf32>
    %9 = arith.addf %8, %7 : vector<8x256xf32>
    %10 = arith.divf %8, %9 : vector<8x256xf32>
    %11 = arith.mulf %5, %10 : vector<8x256xf32>
    %cst_6 = arith.constant 2.000000e+00 : f32
    %12 = vector.broadcast %cst_6 : f32 to vector<8x256xf32>
    %13 = arith.mulf %11, %12 : vector<8x256xf32>
    %c0_7 = arith.constant 0 : index
    %c0_8 = arith.constant 0 : index
    %14 = vector.load %arg4[%c0_7, %c0_8] : memref<8x256xf32, #tpu.memory_space<vmem>>, vector<8x256xf32>
    tpu.vector_store %arg4[%c0_7, %c0_8], %13 {strides = array<i32>} : memref<8x256xf32, #tpu.memory_space<vmem>>, vector<8x256xf32>,
    return
  }
  func.func @transform_0(%arg0: i32) -> (i32, i32) {
    %c0_i32 = arith.constant 0 : i32
    %c0_i32_0 = arith.constant 0 : i32
    %c0_i32_1 = arith.constant 0 : i32
    return %c0_i32, %c0_i32_0 : i32, i32
  }
  func.func @transform_1(%arg0: i32) -> (i32, i32) {
    %c0_i32 = arith.constant 0 : i32
    %c0_i32_0 = arith.constant 0 : i32
    return %arg0, %c0_i32 : i32, i32
  }
  func.func @transform_2(%arg0: i32) -> (i32, i32) {
    %c0_i32 = arith.constant 0 : i32
    %c0_i32_0 = arith.constant 0 : i32
    return %c0_i32, %arg0 : i32, i32
  }
  func.func @transform_3(%arg0: i32) -> (i32, i32) {
    %c0_i32 = arith.constant 0 : i32
    %c0_i32_0 = arith.constant 0 : i32
    return %c0_i32, %arg0 : i32, i32
  }
}

</mosaic_0001>

<llo_original>
// kernel: tpu_custom_call.1
$region0: #{tpu_custom_call.1}
  #allocation0 [shape = 'u32[]', space=smem, size = 0x4, offset = 0x4, fixed_abs, tag = 'smem constant byte address 0x4 - core index']
  #allocation1 [shape = 'u32[144,128]{1,0:T(1,128)}', space=vmem, size = 0x12000, scoped, tag = 'internal scratch']
  %s0 = inlined_call_operand.hbm [shape: f32[8,1024], index: 0, kind: input, shape index: {}]
  %s1 = inlined_call_operand.hbm [shape: f32[512,1024], index: 1, kind: input, shape index: {}]
  %s2 = inlined_call_operand.hbm [shape: f32[1,512], index: 2, kind: input, shape index: {}]
  %s3 = inlined_call_operand.hbm [shape: f32[8,512], index: 3, kind: output, shape index: {}]
  %s4 = sld [smem:[#allocation0]]
  $region57: #{tpu_custom_call.1} parent=0
    _
  %s6 = ssub.s32 1, %s4
  %s7 = scalar_select 0, %s6, %s4
  $region1: #{tpu_custom_call.1} parent=0
    #allocation2 [shape = 'u8[32768]{0}', space=vmem, size = 0x8000, scoped, tag = 'input window, operand 0, single buffered']
    #allocation3 [shape = 's32[2]{0}', space=sflag, size = 0x8, scoped, tag = 'scoped memory for tpu_custom_call.1']
    #allocation4 [shape = 's32[2]{0}', space=sflag, size = 0x8, scoped, tag = 'scoped memory for tpu_custom_call.1']
    #allocation5 [shape = 'u8[2097152]{0}', space=vmem, size = 0x200000, scoped, tag = 'input window, operand 1']
    #allocation6 [shape = 's32[2]{0}', space=sflag, size = 0x8, scoped, tag = 'scoped memory for tpu_custom_call.1']
    #allocation7 [shape = 'u8[2048]{0}', space=vmem, size = 0x800, scoped, tag = 'input window, operand 2']
    #allocation8 [shape = 'u8[16384]{0}', space=vmem, size = 0x4000, scoped, tag = 'output window, operand 0']
    %8 = vsyncpa [#allocation3], 0
    %9 = vsyncpa [#allocation6], 0
    %s10 = scalar_lea.sflag [#allocation6], 1
    %11 = vsyncpa %s10, 0
    %12 = vsyncpa [#allocation4], 0
    %s13 = scalar_lea.sflag [#allocation4], 1
    %14 = vsyncpa %s13, 0
    loop: start=0, step=1, limit=4
    $region2: #{tpu_custom_call.1} parent=1 // loop_pre_header
      _
    $region3: #{tpu_custom_call.1} parent=1 // loop_header
      %s16 = sphi 0, %s20
      %p17 = scmp.ge.s32.totalorder %s16, 4
      %s24 = sphi 0, %s24
      %s26 = sphi 0, %s24
      %s27 = sphi 0, %s26
      %s41 = sphi 0, %s27
      %s47 = sphi 0, %s49
      %s50 = sphi 0, %s47
      %s51 = sphi 0, %s50
      %s67 = sphi 0, %s51
      %s73 = sphi 0, %s75
      %s76 = sphi 0, %s73
      %s77 = sphi 0, %s76
      %s93 = sphi 0, %s77
      %s99 = sphi 0, %s101
      %s102 = sphi 0, %s99
      %s103 = sphi 0, %s102
      %s119 = sphi 0, %s103
    $region4: #{tpu_custom_call.1} parent=1 // loop_header_branch
      %19 = sbr.rel (%p17) target = $region8
    $region5: #{tpu_custom_call.1} parent=1 // loop_body
      %s21 = ssub.s32 %s16, 1
      %s22 = ssub.s32 %s16, 2
      %s23 = sadd.s32 %s16, 1
      %s25 = sadd.s32 %s24, 1
      %p28 = scmp.eq.s32.totalorder %s16, 1
      %p29 = scmp.ne.s32.totalorder %s24, %s26
      %p30 = scmp.eq.s32.totalorder %s16, 0
      %p31 = por %p29, %p30
      %p32 = scmp.ne.s32.totalorder %s24, %s26
      %p33 = scmp.eq.s32.totalorder %s21, 1
      %p34 = por %p32, %p33
      %p35 = scmp.ne.s32.totalorder %s26, %s27
      %p36 = scmp.eq.s32.totalorder %s21, 0
      %p37 = por %p35, %p36
      %p38 = scmp.ne.s32.totalorder %s26, %s27
      %p39 = scmp.eq.s32.totalorder %s22, 1
      %p40 = por %p38, %p39
      %p42 = scmp.ne.s32.totalorder %s27, %s41
      %p43 = scmp.eq.s32.totalorder %s22, 0
      %p44 = por %p42, %p43
      %s45 = ssub.s32 %s16, %s23
      %p46 = scmp.eq.s32.totalorder %s45, 0
      %s48 = sadd.s32 %s47, 1
      %s49 = scalar_select %p46, %s47, %s48
      %p52 = pneg %p46
      %p53 = scmp.eq.s32.totalorder %s16, 1
      %p54 = por %p52, %p53
      %p55 = scmp.ne.s32.totalorder %s47, %s50
      %p56 = scmp.eq.s32.totalorder %s16, 0
      %p57 = por %p55, %p56
      %p58 = scmp.ne.s32.totalorder %s47, %s50
      %p59 = scmp.eq.s32.totalorder %s21, 1
      %p60 = por %p58, %p59
      %p61 = scmp.ne.s32.totalorder %s50, %s51
      %p62 = scmp.eq.s32.totalorder %s21, 0
      %p63 = por %p61, %p62
      %p64 = scmp.ne.s32.totalorder %s50, %s51
      %p65 = scmp.eq.s32.totalorder %s22, 1
      %p66 = por %p64, %p65
      %p68 = scmp.ne.s32.totalorder %s51, %s67
      %p69 = scmp.eq.s32.totalorder %s22, 0
      %p70 = por %p68, %p69
      %s71 = ssub.s32 %s16, %s23
      %p72 = scmp.eq.s32.totalorder %s71, 0
      %s74 = sadd.s32 %s73, 1
      %s75 = scalar_select %p72, %s73, %s74
      %p78 = pneg %p72
      %p79 = scmp.eq.s32.totalorder %s16, 1
      %p80 = por %p78, %p79
      %p81 = scmp.ne.s32.totalorder %s73, %s76
      %p82 = scmp.eq.s32.totalorder %s16, 0
      %p83 = por %p81, %p82
      %p84 = scmp.ne.s32.totalorder %s73, %s76
      %p85 = scmp.eq.s32.totalorder %s21, 1
      %p86 = por %p84, %p85
      %p87 = scmp.ne.s32.totalorder %s76, %s77
      %p88 = scmp.eq.s32.totalorder %s21, 0
      %p89 = por %p87, %p88
      %p90 = scmp.ne.s32.totalorder %s76, %s77
      %p91 = scmp.eq.s32.totalorder %s22, 1
      %p92 = por %p90, %p91
      %p94 = scmp.ne.s32.totalorder %s77, %s93
      %p95 = scmp.eq.s32.totalorder %s22, 0
      %p96 = por %p94, %p95
      %s97 = ssub.s32 %s16, %s23
      %p98 = scmp.eq.s32.totalorder %s97, 0
      %s100 = sadd.s32 %s99, 1
      %s101 = scalar_select %p98, %s99, %s100
      %p104 = pneg %p98
      %p105 = scmp.eq.s32.totalorder %s16, 1
      %p106 = por %p104, %p105
      %p107 = scmp.ne.s32.totalorder %s99, %s102
      %p108 = scmp.eq.s32.totalorder %s16, 0
      %p109 = por %p107, %p108
      %p110 = scmp.ne.s32.totalorder %s99, %s102
      %p111 = scmp.eq.s32.totalorder %s21, 1
      %p112 = por %p110, %p111
      %p113 = scmp.ne.s32.totalorder %s102, %s103
      %p114 = scmp.eq.s32.totalorder %s21, 0
      %p115 = por %p113, %p114
      %p116 = scmp.ne.s32.totalorder %s102, %s103
      %p117 = scmp.eq.s32.totalorder %s22, 1
      %p118 = por %p116, %p117
      %p120 = scmp.ne.s32.totalorder %s103, %s119
      %p121 = scmp.eq.s32.totalorder %s22, 0
      %p122 = por %p120, %p121
      %p123 = scmp.le.s32.totalorder 1, %s16
      %p124 = scmp.lt.s32.totalorder %s16, 3
      %p125 = pnand %p123, %p124
      %p126 = pneg %p125
      // Predicated region
      $region9: #{tpu_custom_call.1} parent=5 // pred_check
        _
      $region10: #{tpu_custom_call.1} parent=5 // pred_check_branch
        %128 = sbr.rel (%p125) target = $region12
      $region11: #{tpu_custom_call.1} parent=5 // pred_region
        %s129 = ssub.s32 %s16, 1
        // Predicated region
        $region13: #{tpu_custom_call.1} parent=11 // pred_check
          %p130 = pneg %p37
        $region14: #{tpu_custom_call.1} parent=11 // pred_check_branch
          %132 = sbr.rel (%p130) target = $region16
        $region15: #{tpu_custom_call.1} parent=11 // pred_region
          %s134 = ssub.s32 1024, 1024
          %135 = vsyncadd [#allocation3], %s134
          %s137 = sshll.u32 [#allocation2], 4
          %s138 = int_to_ptr.vmem [resolvable:$true] %s137
          %140 = dma.hbm_to_vmem [thread:$0]  %s0, 1024, %s138, [#allocation3]
        $region16: #{tpu_custom_call.1} parent=11 // pred_fallthru
          _
      $region12: #{tpu_custom_call.1} parent=5 // pred_fallthru
        _
      %p141 = scmp.lt.s32.totalorder %s16, 2
      // Predicated region
      $region17: #{tpu_custom_call.1} parent=5 // pred_check
        %p142 = pneg %p141
      $region18: #{tpu_custom_call.1} parent=5 // pred_check_branch
        %144 = sbr.rel (%p142) target = $region20
      $region19: #{tpu_custom_call.1} parent=5 // pred_region
        // Predicated region
        $region21: #{tpu_custom_call.1} parent=19 // pred_check
          %p145 = pneg %p57
        $region22: #{tpu_custom_call.1} parent=19 // pred_check_branch
          %147 = sbr.rel (%p145) target = $region24
        $region23: #{tpu_custom_call.1} parent=19 // pred_region
          %s148 = sand.u32 %s16, 1
          %s149 = scalar_lea.sflag [#allocation6], %s148
          %s150 = sand.u32 %s47, 1
          %s151 = smul.addr %s150, 2048
          %s152 = scalar_lea.vmem [#allocation5], %s151
          %s153 = smul.u32 32, %s16
          %s155 = ssub.s32 32768, 32768
          %156 = vsyncadd %s149, %s155
          %s157 = smul.addr %s153, 8
          %s158 = smul.addr %s157, 128
          %s159 = scalar_lea.hbm %s1, %s158
          %s160 = sshll.u32 %s152, 4
          %s161 = int_to_ptr.vmem [resolvable:$true] %s160
          %166 = dma.hbm_to_vmem [thread:$0]  %s159, 32768, %s161, %s149, 1024, 1024, 64
        $region24: #{tpu_custom_call.1} parent=19 // pred_fallthru
          _
        // Predicated region
        $region25: #{tpu_custom_call.1} parent=19 // pred_check
          %p167 = pneg %p83
        $region26: #{tpu_custom_call.1} parent=19 // pred_check_branch
          %169 = sbr.rel (%p167) target = $region28
        $region27: #{tpu_custom_call.1} parent=19 // pred_region
          %s170 = sand.u32 %s16, 1
          %s171 = scalar_lea.sflag [#allocation6], %s170
          %s172 = sand.u32 %s73, 1
          %s173 = smul.addr %s172, 2
          %s174 = scalar_lea.vmem [#allocation7], %s173
          %s175 = smul.u32 2, %s16
          %s177 = ssub.s32 32, 32
          %178 = vsyncadd %s171, %s177
          %s179 = smul.addr %s175, 16
          %s180 = scalar_lea.hbm %s2, %s179
          %s182 = sshll.u32 %s174, 4
          %s183 = int_to_ptr.vmem [resolvable:$true] %s182
          %185 = dma.hbm_to_vmem [thread:$0]  %s180, 32, %s183, %s171
        $region28: #{tpu_custom_call.1} parent=19 // pred_fallthru
          _
      $region20: #{tpu_custom_call.1} parent=5 // pred_fallthru
        _
      %p186 = scmp.le.s32.totalorder 1, %s16
      %p187 = scmp.lt.s32.totalorder %s16, 3
      %p188 = pnand %p186, %p187
      %p189 = pneg %p188
      // Predicated region
      $region29: #{tpu_custom_call.1} parent=5 // pred_check
        _
      $region30: #{tpu_custom_call.1} parent=5 // pred_check_branch
        %191 = sbr.rel (%p188) target = $region32
      $region31: #{tpu_custom_call.1} parent=5 // pred_region
        %s192 = ssub.s32 %s16, 1
        // Predicated region
        $region33: #{tpu_custom_call.1} parent=31 // pred_check
          %p193 = pneg %p37
        $region34: #{tpu_custom_call.1} parent=31 // pred_check_branch
          %195 = sbr.rel (%p193) target = $region36
        $region35: #{tpu_custom_call.1} parent=31 // pred_region
          %196 = dma.done [#allocation3], 1024
        $region36: #{tpu_custom_call.1} parent=31 // pred_fallthru
          _
        %s197 = sand.u32 %s21, 1
        %s198 = scalar_lea.sflag [#allocation6], %s197
        %s199 = sand.u32 %s50, 1
        %s200 = smul.addr %s199, 2048
        %s201 = scalar_lea.vmem [#allocation5], %s200
        // Predicated region
        $region37: #{tpu_custom_call.1} parent=31 // pred_check
          %p202 = pneg %p63
        $region38: #{tpu_custom_call.1} parent=31 // pred_check_branch
          %204 = sbr.rel (%p202) target = $region40
        $region39: #{tpu_custom_call.1} parent=31 // pred_region
          %205 = dma.done %s198, 32768
        $region40: #{tpu_custom_call.1} parent=31 // pred_fallthru
          _
        %s206 = sand.u32 %s21, 1
        %s207 = scalar_lea.sflag [#allocation6], %s206
        %s208 = sand.u32 %s76, 1
        %s209 = smul.addr %s208, 2
        %s210 = scalar_lea.vmem [#allocation7], %s209
        // Predicated region
        $region41: #{tpu_custom_call.1} parent=31 // pred_check
          %p211 = pneg %p89
        $region42: #{tpu_custom_call.1} parent=31 // pred_check_branch
          %213 = sbr.rel (%p211) target = $region44
        $region43: #{tpu_custom_call.1} parent=31 // pred_region
          %214 = dma.done %s207, 32
        $region44: #{tpu_custom_call.1} parent=31 // pred_fallthru
          _
        %p215 = pneg %p37
        %p216 = pneg %p34
        %s217 = sand.u32 %s21, 1
        %s218 = scalar_lea.sflag [#allocation6], %s217
        %s219 = sand.u32 %s50, 1
        %s220 = smul.addr %s219, 2048
        %s221 = scalar_lea.vmem [#allocation5], %s220
        %p222 = pneg %p63
        %p223 = pneg %p60
        %s224 = sand.u32 %s21, 1
        %s225 = scalar_lea.sflag [#allocation6], %s224
        %s226 = sand.u32 %s76, 1
        %s227 = smul.addr %s226, 2
        %s228 = scalar_lea.vmem [#allocation7], %s227
        %p229 = pneg %p89
        %p230 = pneg %p86
        %p231 = pneg %p115
        %p232 = pneg %p112
        %s233 = sand.u32 %s102, 1
        %s234 = scalar_lea.sflag [#allocation4], %s233
        %s235 = sand.u32 %s102, 1
        %s236 = smul.addr %s235, 16
        %s237 = scalar_lea.vmem [#allocation8], %s236
        %s238 = smul.u32 32, %s21
        %s239 = smul.u32 2, %s21
        %s240 = smul.u32 2, %s21
        %v241 = vld [vmem:[#allocation2] sm:$0xff]
        %v242 = vld [vmem:[#allocation2 + $0x8] sm:$0xff]
        %v243 = vld [vmem:[#allocation2 + $0x10] sm:$0xff]
        %v244 = vld [vmem:[#allocation2 + $0x18] sm:$0xff]
        %v245 = vld [vmem:[#allocation2 + $0x20] sm:$0xff]
        %v246 = vld [vmem:[#allocation2 + $0x28] sm:$0xff]
        %v247 = vld [vmem:[#allocation2 + $0x30] sm:$0xff]
        %v248 = vld [vmem:[#allocation2 + $0x38] sm:$0xff]
        %v249 = vld [vmem:[%s201] sm:$0xff]
        %v250 = vld [vmem:[%s201 + $0x8] sm:$0xff]
        %v251 = vld [vmem:[%s201 + $0x10] sm:$0xff]
        %v252 = vld [vmem:[%s201 + $0x18] sm:$0xff]
        %v253 = vld [vmem:[%s201 + $0x20] sm:$0xff]
        %v254 = vld [vmem:[%s201 + $0x28] sm:$0xff]
        %v255 = vld [vmem:[%s201 + $0x30] sm:$0xff]
        %v256 = vld [vmem:[%s201 + $0x38] sm:$0xff]
        %v257 = vld [vmem:[%s201 + $0x40] sm:$0xff]
        %v258 = vld [vmem:[%s201 + $0x48] sm:$0xff]
        %v259 = vld [vmem:[%s201 + $0x50] sm:$0xff]
        %v260 = vld [vmem:[%s201 + $0x58] sm:$0xff]
        %v261 = vld [vmem:[%s201 + $0x60] sm:$0xff]
        %v262 = vld [vmem:[%s201 + $0x68] sm:$0xff]
        %v263 = vld [vmem:[%s201 + $0x70] sm:$0xff]
        %v264 = vld [vmem:[%s201 + $0x78] sm:$0xff]
        %v265 = vld [vmem:[%s201 + $0x80] sm:$0xff]
        %v266 = vld [vmem:[%s201 + $0x88] sm:$0xff]
        %v267 = vld [vmem:[%s201 + $0x90] sm:$0xff]
        %v268 = vld [vmem:[%s201 + $0x98] sm:$0xff]
        %v269 = vld [vmem:[%s201 + $0xa0] sm:$0xff]
        %v270 = vld [vmem:[%s201 + $0xa8] sm:$0xff]
        %v271 = vld [vmem:[%s201 + $0xb0] sm:$0xff]
        %v272 = vld [vmem:[%s201 + $0xb8] sm:$0xff]
        %v273 = vld [vmem:[%s201 + $0xc0] sm:$0xff]
        %v274 = vld [vmem:[%s201 + $0xc8] sm:$0xff]
        %v275 = vld [vmem:[%s201 + $0xd0] sm:$0xff]
        %v276 = vld [vmem:[%s201 + $0xd8] sm:$0xff]
        %v277 = vld [vmem:[%s201 + $0xe0] sm:$0xff]
        %v278 = vld [vmem:[%s201 + $0xe8] sm:$0xff]
        %v279 = vld [vmem:[%s201 + $0xf0] sm:$0xff]
        %v280 = vld [vmem:[%s201 + $0xf8] sm:$0xff]
        %v281 = vld [vmem:[%s201 + $0x100] sm:$0xff]
        %v282 = vld [vmem:[%s201 + $0x108] sm:$0xff]
        %v283 = vld [vmem:[%s201 + $0x110] sm:$0xff]
        %v284 = vld [vmem:[%s201 + $0x118] sm:$0xff]
        %v285 = vld [vmem:[%s201 + $0x120] sm:$0xff]
        %v286 = vld [vmem:[%s201 + $0x128] sm:$0xff]
        %v287 = vld [vmem:[%s201 + $0x130] sm:$0xff]
        %v288 = vld [vmem:[%s201 + $0x138] sm:$0xff]
        %v289 = vld [vmem:[%s201 + $0x140] sm:$0xff]
        %v290 = vld [vmem:[%s201 + $0x148] sm:$0xff]
        %v291 = vld [vmem:[%s201 + $0x150] sm:$0xff]
        %v292 = vld [vmem:[%s201 + $0x158] sm:$0xff]
        %v293 = vld [vmem:[%s201 + $0x160] sm:$0xff]
        %v294 = vld [vmem:[%s201 + $0x168] sm:$0xff]
        %v295 = vld [vmem:[%s201 + $0x170] sm:$0xff]
        %v296 = vld [vmem:[%s201 + $0x178] sm:$0xff]
        %v297 = vld [vmem:[%s201 + $0x180] sm:$0xff]
        %v298 = vld [vmem:[%s201 + $0x188] sm:$0xff]
        %v299 = vld [vmem:[%s201 + $0x190] sm:$0xff]
        %v300 = vld [vmem:[%s201 + $0x198] sm:$0xff]
        %v301 = vld [vmem:[%s201 + $0x1a0] sm:$0xff]
        %v302 = vld [vmem:[%s201 + $0x1a8] sm:$0xff]
        %v303 = vld [vmem:[%s201 + $0x1b0] sm:$0xff]
        %v304 = vld [vmem:[%s201 + $0x1b8] sm:$0xff]
        %v305 = vld [vmem:[%s201 + $0x1c0] sm:$0xff]
        %v306 = vld [vmem:[%s201 + $0x1c8] sm:$0xff]
        %v307 = vld [vmem:[%s201 + $0x1d0] sm:$0xff]
        %v308 = vld [vmem:[%s201 + $0x1d8] sm:$0xff]
        %v309 = vld [vmem:[%s201 + $0x1e0] sm:$0xff]
        %v310 = vld [vmem:[%s201 + $0x1e8] sm:$0xff]
        %v311 = vld [vmem:[%s201 + $0x1f0] sm:$0xff]
        %v312 = vld [vmem:[%s201 + $0x1f8] sm:$0xff]
        %v313 = vld [vmem:[%s201 + $0x200] sm:$0xff]
        %v314 = vld [vmem:[%s201 + $0x208] sm:$0xff]
        %v315 = vld [vmem:[%s201 + $0x210] sm:$0xff]
        %v316 = vld [vmem:[%s201 + $0x218] sm:$0xff]
        %v317 = vld [vmem:[%s201 + $0x220] sm:$0xff]
        %v318 = vld [vmem:[%s201 + $0x228] sm:$0xff]
        %v319 = vld [vmem:[%s201 + $0x230] sm:$0xff]
        %v320 = vld [vmem:[%s201 + $0x238] sm:$0xff]
        %v321 = vld [vmem:[%s201 + $0x240] sm:$0xff]
        %v322 = vld [vmem:[%s201 + $0x248] sm:$0xff]
        %v323 = vld [vmem:[%s201 + $0x250] sm:$0xff]
        %v324 = vld [vmem:[%s201 + $0x258] sm:$0xff]
        %v325 = vld [vmem:[%s201 + $0x260] sm:$0xff]
        %v326 = vld [vmem:[%s201 + $0x268] sm:$0xff]
        %v327 = vld [vmem:[%s201 + $0x270] sm:$0xff]
        %v328 = vld [vmem:[%s201 + $0x278] sm:$0xff]
        %v329 = vld [vmem:[%s201 + $0x280] sm:$0xff]
        %v330 = vld [vmem:[%s201 + $0x288] sm:$0xff]
        %v331 = vld [vmem:[%s201 + $0x290] sm:$0xff]
        %v332 = vld [vmem:[%s201 + $0x298] sm:$0xff]
        %v333 = vld [vmem:[%s201 + $0x2a0] sm:$0xff]
        %v334 = vld [vmem:[%s201 + $0x2a8] sm:$0xff]
        %v335 = vld [vmem:[%s201 + $0x2b0] sm:$0xff]
        %v336 = vld [vmem:[%s201 + $0x2b8] sm:$0xff]
        %v337 = vld [vmem:[%s201 + $0x2c0] sm:$0xff]
        %v338 = vld [vmem:[%s201 + $0x2c8] sm:$0xff]
        %v339 = vld [vmem:[%s201 + $0x2d0] sm:$0xff]
        %v340 = vld [vmem:[%s201 + $0x2d8] sm:$0xff]
        %v341 = vld [vmem:[%s201 + $0x2e0] sm:$0xff]
        %v342 = vld [vmem:[%s201 + $0x2e8] sm:$0xff]
        %v343 = vld [vmem:[%s201 + $0x2f0] sm:$0xff]
        %v344 = vld [vmem:[%s201 + $0x2f8] sm:$0xff]
        %v345 = vld [vmem:[%s201 + $0x300] sm:$0xff]
        %v346 = vld [vmem:[%s201 + $0x308] sm:$0xff]
        %v347 = vld [vmem:[%s201 + $0x310] sm:$0xff]
        %v348 = vld [vmem:[%s201 + $0x318] sm:$0xff]
        %v349 = vld [vmem:[%s201 + $0x320] sm:$0xff]
        %v350 = vld [vmem:[%s201 + $0x328] sm:$0xff]
        %v351 = vld [vmem:[%s201 + $0x330] sm:$0xff]
        %v352 = vld [vmem:[%s201 + $0x338] sm:$0xff]
        %v353 = vld [vmem:[%s201 + $0x340] sm:$0xff]
        %v354 = vld [vmem:[%s201 + $0x348] sm:$0xff]
        %v355 = vld [vmem:[%s201 + $0x350] sm:$0xff]
        %v356 = vld [vmem:[%s201 + $0x358] sm:$0xff]
        %v357 = vld [vmem:[%s201 + $0x360] sm:$0xff]
        %v358 = vld [vmem:[%s201 + $0x368] sm:$0xff]
        %v359 = vld [vmem:[%s201 + $0x370] sm:$0xff]
        %v360 = vld [vmem:[%s201 + $0x378] sm:$0xff]
        %v361 = vld [vmem:[%s201 + $0x380] sm:$0xff]
        %v362 = vld [vmem:[%s201 + $0x388] sm:$0xff]
        %v363 = vld [vmem:[%s201 + $0x390] sm:$0xff]
        %v364 = vld [vmem:[%s201 + $0x398] sm:$0xff]
        %v365 = vld [vmem:[%s201 + $0x3a0] sm:$0xff]
        %v366 = vld [vmem:[%s201 + $0x3a8] sm:$0xff]
        %v367 = vld [vmem:[%s201 + $0x3b0] sm:$0xff]
        %v368 = vld [vmem:[%s201 + $0x3b8] sm:$0xff]
        %v369 = vld [vmem:[%s201 + $0x3c0] sm:$0xff]
        %v370 = vld [vmem:[%s201 + $0x3c8] sm:$0xff]
        %v371 = vld [vmem:[%s201 + $0x3d0] sm:$0xff]
        %v372 = vld [vmem:[%s201 + $0x3d8] sm:$0xff]
        %v373 = vld [vmem:[%s201 + $0x3e0] sm:$0xff]
        %v374 = vld [vmem:[%s201 + $0x3e8] sm:$0xff]
        %v375 = vld [vmem:[%s201 + $0x3f0] sm:$0xff]
        %v376 = vld [vmem:[%s201 + $0x3f8] sm:$0xff]
        %v377 = vld [vmem:[%s201 + $0x400] sm:$0xff]
        %v378 = vld [vmem:[%s201 + $0x408] sm:$0xff]
        %v379 = vld [vmem:[%s201 + $0x410] sm:$0xff]
        %v380 = vld [vmem:[%s201 + $0x418] sm:$0xff]
        %v381 = vld [vmem:[%s201 + $0x420] sm:$0xff]
        %v382 = vld [vmem:[%s201 + $0x428] sm:$0xff]
        %v383 = vld [vmem:[%s201 + $0x430] sm:$0xff]
        %v384 = vld [vmem:[%s201 + $0x438] sm:$0xff]
        %v385 = vld [vmem:[%s201 + $0x440] sm:$0xff]
        %v386 = vld [vmem:[%s201 + $0x448] sm:$0xff]
        %v387 = vld [vmem:[%s201 + $0x450] sm:$0xff]
        %v388 = vld [vmem:[%s201 + $0x458] sm:$0xff]
        %v389 = vld [vmem:[%s201 + $0x460] sm:$0xff]
        %v390 = vld [vmem:[%s201 + $0x468] sm:$0xff]
        %v391 = vld [vmem:[%s201 + $0x470] sm:$0xff]
        %v392 = vld [vmem:[%s201 + $0x478] sm:$0xff]
        %v393 = vld [vmem:[%s201 + $0x480] sm:$0xff]
        %v394 = vld [vmem:[%s201 + $0x488] sm:$0xff]
        %v395 = vld [vmem:[%s201 + $0x490] sm:$0xff]
        %v396 = vld [vmem:[%s201 + $0x498] sm:$0xff]
        %v397 = vld [vmem:[%s201 + $0x4a0] sm:$0xff]
        %v398 = vld [vmem:[%s201 + $0x4a8] sm:$0xff]
        %v399 = vld [vmem:[%s201 + $0x4b0] sm:$0xff]
        %v400 = vld [vmem:[%s201 + $0x4b8] sm:$0xff]
        %v401 = vld [vmem:[%s201 + $0x4c0] sm:$0xff]
        %v402 = vld [vmem:[%s201 + $0x4c8] sm:$0xff]
        %v403 = vld [vmem:[%s201 + $0x4d0] sm:$0xff]
        %v404 = vld [vmem:[%s201 + $0x4d8] sm:$0xff]
        %v405 = vld [vmem:[%s201 + $0x4e0] sm:$0xff]
        %v406 = vld [vmem:[%s201 + $0x4e8] sm:$0xff]
        %v407 = vld [vmem:[%s201 + $0x4f0] sm:$0xff]
        %v408 = vld [vmem:[%s201 + $0x4f8] sm:$0xff]
        %v409 = vld [vmem:[%s201 + $0x500] sm:$0xff]
        %v410 = vld [vmem:[%s201 + $0x508] sm:$0xff]
        %v411 = vld [vmem:[%s201 + $0x510] sm:$0xff]
        %v412 = vld [vmem:[%s201 + $0x518] sm:$0xff]
        %v413 = vld [vmem:[%s201 + $0x520] sm:$0xff]
        %v414 = vld [vmem:[%s201 + $0x528] sm:$0xff]
        %v415 = vld [vmem:[%s201 + $0x530] sm:$0xff]
        %v416 = vld [vmem:[%s201 + $0x538] sm:$0xff]
        %v417 = vld [vmem:[%s201 + $0x540] sm:$0xff]
        %v418 = vld [vmem:[%s201 + $0x548] sm:$0xff]
        %v419 = vld [vmem:[%s201 + $0x550] sm:$0xff]
        %v420 = vld [vmem:[%s201 + $0x558] sm:$0xff]
        %v421 = vld [vmem:[%s201 + $0x560] sm:$0xff]
        %v422 = vld [vmem:[%s201 + $0x568] sm:$0xff]
        %v423 = vld [vmem:[%s201 + $0x570] sm:$0xff]
        %v424 = vld [vmem:[%s201 + $0x578] sm:$0xff]
        %v425 = vld [vmem:[%s201 + $0x580] sm:$0xff]
        %v426 = vld [vmem:[%s201 + $0x588] sm:$0xff]
        %v427 = vld [vmem:[%s201 + $0x590] sm:$0xff]
        %v428 = vld [vmem:[%s201 + $0x598] sm:$0xff]
        %v429 = vld [vmem:[%s201 + $0x5a0] sm:$0xff]
        %v430 = vld [vmem:[%s201 + $0x5a8] sm:$0xff]
        %v431 = vld [vmem:[%s201 + $0x5b0] sm:$0xff]
        %v432 = vld [vmem:[%s201 + $0x5b8] sm:$0xff]
        %v433 = vld [vmem:[%s201 + $0x5c0] sm:$0xff]
        %v434 = vld [vmem:[%s201 + $0x5c8] sm:$0xff]
        %v435 = vld [vmem:[%s201 + $0x5d0] sm:$0xff]
        %v436 = vld [vmem:[%s201 + $0x5d8] sm:$0xff]
        %v437 = vld [vmem:[%s201 + $0x5e0] sm:$0xff]
        %v438 = vld [vmem:[%s201 + $0x5e8] sm:$0xff]
        %v439 = vld [vmem:[%s201 + $0x5f0] sm:$0xff]
        %v440 = vld [vmem:[%s201 + $0x5f8] sm:$0xff]
        %v441 = vld [vmem:[%s201 + $0x600] sm:$0xff]
        %v442 = vld [vmem:[%s201 + $0x608] sm:$0xff]
        %v443 = vld [vmem:[%s201 + $0x610] sm:$0xff]
        %v444 = vld [vmem:[%s201 + $0x618] sm:$0xff]
        %v445 = vld [vmem:[%s201 + $0x620] sm:$0xff]
        %v446 = vld [vmem:[%s201 + $0x628] sm:$0xff]
        %v447 = vld [vmem:[%s201 + $0x630] sm:$0xff]
        %v448 = vld [vmem:[%s201 + $0x638] sm:$0xff]
        %v449 = vld [vmem:[%s201 + $0x640] sm:$0xff]
        %v450 = vld [vmem:[%s201 + $0x648] sm:$0xff]
        %v451 = vld [vmem:[%s201 + $0x650] sm:$0xff]
        %v452 = vld [vmem:[%s201 + $0x658] sm:$0xff]
        %v453 = vld [vmem:[%s201 + $0x660] sm:$0xff]
        %v454 = vld [vmem:[%s201 + $0x668] sm:$0xff]
        %v455 = vld [vmem:[%s201 + $0x670] sm:$0xff]
        %v456 = vld [vmem:[%s201 + $0x678] sm:$0xff]
        %v457 = vld [vmem:[%s201 + $0x680] sm:$0xff]
        %v458 = vld [vmem:[%s201 + $0x688] sm:$0xff]
        %v459 = vld [vmem:[%s201 + $0x690] sm:$0xff]
        %v460 = vld [vmem:[%s201 + $0x698] sm:$0xff]
        %v461 = vld [vmem:[%s201 + $0x6a0] sm:$0xff]
        %v462 = vld [vmem:[%s201 + $0x6a8] sm:$0xff]
        %v463 = vld [vmem:[%s201 + $0x6b0] sm:$0xff]
        %v464 = vld [vmem:[%s201 + $0x6b8] sm:$0xff]
        %v465 = vld [vmem:[%s201 + $0x6c0] sm:$0xff]
        %v466 = vld [vmem:[%s201 + $0x6c8] sm:$0xff]
        %v467 = vld [vmem:[%s201 + $0x6d0] sm:$0xff]
        %v468 = vld [vmem:[%s201 + $0x6d8] sm:$0xff]
        %v469 = vld [vmem:[%s201 + $0x6e0] sm:$0xff]
        %v470 = vld [vmem:[%s201 + $0x6e8] sm:$0xff]
        %v471 = vld [vmem:[%s201 + $0x6f0] sm:$0xff]
        %v472 = vld [vmem:[%s201 + $0x6f8] sm:$0xff]
        %v473 = vld [vmem:[%s201 + $0x700] sm:$0xff]
        %v474 = vld [vmem:[%s201 + $0x708] sm:$0xff]
        %v475 = vld [vmem:[%s201 + $0x710] sm:$0xff]
        %v476 = vld [vmem:[%s201 + $0x718] sm:$0xff]
        %v477 = vld [vmem:[%s201 + $0x720] sm:$0xff]
        %v478 = vld [vmem:[%s201 + $0x728] sm:$0xff]
        %v479 = vld [vmem:[%s201 + $0x730] sm:$0xff]
        %v480 = vld [vmem:[%s201 + $0x738] sm:$0xff]
        %v481 = vld [vmem:[%s201 + $0x740] sm:$0xff]
        %v482 = vld [vmem:[%s201 + $0x748] sm:$0xff]
        %v483 = vld [vmem:[%s201 + $0x750] sm:$0xff]
        %v484 = vld [vmem:[%s201 + $0x758] sm:$0xff]
        %v485 = vld [vmem:[%s201 + $0x760] sm:$0xff]
        %v486 = vld [vmem:[%s201 + $0x768] sm:$0xff]
        %v487 = vld [vmem:[%s201 + $0x770] sm:$0xff]
        %v488 = vld [vmem:[%s201 + $0x778] sm:$0xff]
        %v489 = vld [vmem:[%s201 + $0x780] sm:$0xff]
        %v490 = vld [vmem:[%s201 + $0x788] sm:$0xff]
        %v491 = vld [vmem:[%s201 + $0x790] sm:$0xff]
        %v492 = vld [vmem:[%s201 + $0x798] sm:$0xff]
        %v493 = vld [vmem:[%s201 + $0x7a0] sm:$0xff]
        %v494 = vld [vmem:[%s201 + $0x7a8] sm:$0xff]
        %v495 = vld [vmem:[%s201 + $0x7b0] sm:$0xff]
        %v496 = vld [vmem:[%s201 + $0x7b8] sm:$0xff]
        %v497 = vld [vmem:[%s201 + $0x7c0] sm:$0xff]
        %v498 = vld [vmem:[%s201 + $0x7c8] sm:$0xff]
        %v499 = vld [vmem:[%s201 + $0x7d0] sm:$0xff]
        %v500 = vld [vmem:[%s201 + $0x7d8] sm:$0xff]
        %v501 = vld [vmem:[%s201 + $0x7e0] sm:$0xff]
        %v502 = vld [vmem:[%s201 + $0x7e8] sm:$0xff]
        %v503 = vld [vmem:[%s201 + $0x7f0] sm:$0xff]
        %v504 = vld [vmem:[%s201 + $0x7f8] sm:$0xff]
        %v505 = vld [vmem:[%s210] sm:$0x3]
        %v507 = vlaneseq
        %v508 = vshrl.u32 %v507, 7
        %v509 = vsub.s32 0, %v508
        %v510 = vrot.slane %v505, %v509
        %v511 = vlaneseq
        %v512 = vshrl.u32 %v511, 7
        %v513 = vsub.s32 1, %v512
        %v514 = vrot.slane %v505, %v513
        %517 = vmatprep.subr.mxu0 %v250
        %518 = vmatpush1.xpose.msra.mxu0 %v249
        %519 = vmatprep.subr.mxu0 %v258
        %520 = vmatpush1.xpose.msra.mxu0 %v257
        %521 = vmatprep.subr.mxu0 %v266
        %522 = vmatpush1.xpose.msra.mxu0 %v265
        %523 = vmatprep.subr.mxu0 %v274
        %524 = vmatpush1.xpose.msra.mxu0 %v273
        %525 = vmatprep.subr.mxu0 %v282
        %526 = vmatpush1.xpose.msra.mxu0 %v281
        %527 = vmatprep.subr.mxu0 %v290
        %528 = vmatpush1.xpose.msra.mxu0 %v289
        %529 = vmatprep.subr.mxu0 %v298
        %530 = vmatpush1.xpose.msra.mxu0 %v297
        %531 = vmatprep.subr.mxu0 %v306
        %532 = vmatpush1.xpose.msra.mxu0 %v305
        %533 = vmatprep.subr.mxu0 %v314
        %534 = vmatpush1.xpose.msra.mxu0 %v313
        %535 = vmatprep.subr.mxu0 %v322
        %536 = vmatpush1.xpose.msra.mxu0 %v321
        %537 = vmatprep.subr.mxu0 %v330
        %538 = vmatpush1.xpose.msra.mxu0 %v329
        %539 = vmatprep.subr.mxu0 %v338
        %540 = vmatpush1.xpose.msra.mxu0 %v337
        %541 = vmatprep.subr.mxu0 %v346
        %542 = vmatpush1.xpose.msra.mxu0 %v345
        %543 = vmatprep.subr.mxu0 %v354
        %544 = vmatpush1.xpose.msra.mxu0 %v353
        %545 = vmatprep.subr.mxu0 %v362
        %546 = vmatpush1.xpose.msra.mxu0 %v361
        %547 = vmatprep.subr.mxu0 %v370
        %548 = vmatpush1.xpose.msra.mxu0 %v369
        %549 = vmatprep.subr.mxu0 %v378
        %550 = vmatpush1.xpose.msra.mxu0 %v377
        %551 = vmatprep.subr.mxu0 %v386
        %552 = vmatpush1.xpose.msra.mxu0 %v385
        %553 = vmatprep.subr.mxu0 %v394
        %554 = vmatpush1.xpose.msra.mxu0 %v393
        %555 = vmatprep.subr.mxu0 %v402
        %556 = vmatpush1.xpose.msra.mxu0 %v401
        %557 = vmatprep.subr.mxu0 %v410
        %558 = vmatpush1.xpose.msra.mxu0 %v409
        %559 = vmatprep.subr.mxu0 %v418
        %560 = vmatpush1.xpose.msra.mxu0 %v417
        %561 = vmatprep.subr.mxu0 %v426
        %562 = vmatpush1.xpose.msra.mxu0 %v425
        %563 = vmatprep.subr.mxu0 %v434
        %564 = vmatpush1.xpose.msra.mxu0 %v433
        %565 = vmatprep.subr.mxu0 %v442
        %566 = vmatpush1.xpose.msra.mxu0 %v441
        %567 = vmatprep.subr.mxu0 %v450
        %568 = vmatpush1.xpose.msra.mxu0 %v449
        %569 = vmatprep.subr.mxu0 %v458
        %570 = vmatpush1.xpose.msra.mxu0 %v457
        %571 = vmatprep.subr.mxu0 %v466
        %572 = vmatpush1.xpose.msra.mxu0 %v465
        %573 = vmatprep.subr.mxu0 %v474
        %574 = vmatpush1.xpose.msra.mxu0 %v473
        %575 = vmatprep.subr.mxu0 %v482
        %576 = vmatpush1.xpose.msra.mxu0 %v481
        %577 = vmatprep.subr.mxu0 %v490
        %578 = vmatpush1.xpose.msra.mxu0 %v489
        %579 = vmatprep.subr.mxu0 %v498
        %580 = vmatpush1.xpose.msra.mxu0 %v497
        %581 = vmatprep.mubr.f32.mxu0 %v242
        %582 = vmatmul.mubr.f32.gmra.mrb[0].mxu0 %v241
        %v583 = vpop.f32.mrb[0].mxu0
        %v584 = vadd.f32 %v510, %v583
        %v585 = vpop.f32.mrb[0].mxu0
        %v586 = vadd.f32 %v514, %v585
        %587 = vdwg.mxu0
        %588 = vmatprep.subr.mxu0 %v252
        %589 = vmatpush1.xpose.msra.mxu0 %v251
        %590 = vmatprep.subr.mxu0 %v260
        %591 = vmatpush1.xpose.msra.mxu0 %v259
        %592 = vmatprep.subr.mxu0 %v268
        %593 = vmatpush1.xpose.msra.mxu0 %v267
        %594 = vmatprep.subr.mxu0 %v276
        %595 = vmatpush1.xpose.msra.mxu0 %v275
        %596 = vmatprep.subr.mxu0 %v284
        %597 = vmatpush1.xpose.msra.mxu0 %v283
        %598 = vmatprep.subr.mxu0 %v292
        %599 = vmatpush1.xpose.msra.mxu0 %v291
        %600 = vmatprep.subr.mxu0 %v300
        %601 = vmatpush1.xpose.msra.mxu0 %v299
        %602 = vmatprep.subr.mxu0 %v308
        %603 = vmatpush1.xpose.msra.mxu0 %v307
        %604 = vmatprep.subr.mxu0 %v316
        %605 = vmatpush1.xpose.msra.mxu0 %v315
        %606 = vmatprep.subr.mxu0 %v324
        %607 = vmatpush1.xpose.msra.mxu0 %v323
        %608 = vmatprep.subr.mxu0 %v332
        %609 = vmatpush1.xpose.msra.mxu0 %v331
        %610 = vmatprep.subr.mxu0 %v340
        %611 = vmatpush1.xpose.msra.mxu0 %v339
        %612 = vmatprep.subr.mxu0 %v348
        %613 = vmatpush1.xpose.msra.mxu0 %v347
        %614 = vmatprep.subr.mxu0 %v356
        %615 = vmatpush1.xpose.msra.mxu0 %v355
        %616 = vmatprep.subr.mxu0 %v364
        %617 = vmatpush1.xpose.msra.mxu0 %v363
        %618 = vmatprep.subr.mxu0 %v372
        %619 = vmatpush1.xpose.msra.mxu0 %v371
        %620 = vmatprep.subr.mxu0 %v380
        %621 = vmatpush1.xpose.msra.mxu0 %v379
        %622 = vmatprep.subr.mxu0 %v388
        %623 = vmatpush1.xpose.msra.mxu0 %v387
        %624 = vmatprep.subr.mxu0 %v396
        %625 = vmatpush1.xpose.msra.mxu0 %v395
        %626 = vmatprep.subr.mxu0 %v404
        %627 = vmatpush1.xpose.msra.mxu0 %v403
        %628 = vmatprep.subr.mxu0 %v412
        %629 = vmatpush1.xpose.msra.mxu0 %v411
        %630 = vmatprep.subr.mxu0 %v420
        %631 = vmatpush1.xpose.msra.mxu0 %v419
        %632 = vmatprep.subr.mxu0 %v428
        %633 = vmatpush1.xpose.msra.mxu0 %v427
        %634 = vmatprep.subr.mxu0 %v436
        %635 = vmatpush1.xpose.msra.mxu0 %v435
        %636 = vmatprep.subr.mxu0 %v444
        %637 = vmatpush1.xpose.msra.mxu0 %v443
        %638 = vmatprep.subr.mxu0 %v452
        %639 = vmatpush1.xpose.msra.mxu0 %v451
        %640 = vmatprep.subr.mxu0 %v460
        %641 = vmatpush1.xpose.msra.mxu0 %v459
        %642 = vmatprep.subr.mxu0 %v468
        %643 = vmatpush1.xpose.msra.mxu0 %v467
        %644 = vmatprep.subr.mxu0 %v476
        %645 = vmatpush1.xpose.msra.mxu0 %v475
        %646 = vmatprep.subr.mxu0 %v484
        %647 = vmatpush1.xpose.msra.mxu0 %v483
        %648 = vmatprep.subr.mxu0 %v492
        %649 = vmatpush1.xpose.msra.mxu0 %v491
        %650 = vmatprep.subr.mxu0 %v500
        %651 = vmatpush1.xpose.msra.mxu0 %v499
        %652 = vmatprep.mubr.f32.mxu0 %v244
        %653 = vmatmul.mubr.f32.gmra.mrb[0].mxu0 %v243
        %v654 = vpop.f32.mrb[0].mxu0
        %v655 = vadd.f32 %v584, %v654
        %v656 = vpop.f32.mrb[0].mxu0
        %v657 = vadd.f32 %v586, %v656
        %658 = vdwg.mxu0
        %659 = vmatprep.subr.mxu0 %v254
        %660 = vmatpush1.xpose.msra.mxu0 %v253
        %661 = vmatprep.subr.mxu0 %v262
        %662 = vmatpush1.xpose.msra.mxu0 %v261
        %663 = vmatprep.subr.mxu0 %v270
        %664 = vmatpush1.xpose.msra.mxu0 %v269
        %665 = vmatprep.subr.mxu0 %v278
        %666 = vmatpush1.xpose.msra.mxu0 %v277
        %667 = vmatprep.subr.mxu0 %v286
        %668 = vmatpush1.xpose.msra.mxu0 %v285
        %669 = vmatprep.subr.mxu0 %v294
        %670 = vmatpush1.xpose.msra.mxu0 %v293
        %671 = vmatprep.subr.mxu0 %v302
        %672 = vmatpush1.xpose.msra.mxu0 %v301
        %673 = vmatprep.subr.mxu0 %v310
        %674 = vmatpush1.xpose.msra.mxu0 %v309
        %675 = vmatprep.subr.mxu0 %v318
        %676 = vmatpush1.xpose.msra.mxu0 %v317
        %677 = vmatprep.subr.mxu0 %v326
        %678 = vmatpush1.xpose.msra.mxu0 %v325
        %679 = vmatprep.subr.mxu0 %v334
        %680 = vmatpush1.xpose.msra.mxu0 %v333
        %681 = vmatprep.subr.mxu0 %v342
        %682 = vmatpush1.xpose.msra.mxu0 %v341
        %683 = vmatprep.subr.mxu0 %v350
        %684 = vmatpush1.xpose.msra.mxu0 %v349
        %685 = vmatprep.subr.mxu0 %v358
        %686 = vmatpush1.xpose.msra.mxu0 %v357
        %687 = vmatprep.subr.mxu0 %v366
        %688 = vmatpush1.xpose.msra.mxu0 %v365
        %689 = vmatprep.subr.mxu0 %v374
        %690 = vmatpush1.xpose.msra.mxu0 %v373
        %691 = vmatprep.subr.mxu0 %v382
        %692 = vmatpush1.xpose.msra.mxu0 %v381
        %693 = vmatprep.subr.mxu0 %v390
        %694 = vmatpush1.xpose.msra.mxu0 %v389
        %695 = vmatprep.subr.mxu0 %v398
        %696 = vmatpush1.xpose.msra.mxu0 %v397
        %697 = vmatprep.subr.mxu0 %v406
        %698 = vmatpush1.xpose.msra.mxu0 %v405
        %699 = vmatprep.subr.mxu0 %v414
        %700 = vmatpush1.xpose.msra.mxu0 %v413
        %701 = vmatprep.subr.mxu0 %v422
        %702 = vmatpush1.xpose.msra.mxu0 %v421
        %703 = vmatprep.subr.mxu0 %v430
        %704 = vmatpush1.xpose.msra.mxu0 %v429
        %705 = vmatprep.subr.mxu0 %v438
        %706 = vmatpush1.xpose.msra.mxu0 %v437
        %707 = vmatprep.subr.mxu0 %v446
        %708 = vmatpush1.xpose.msra.mxu0 %v445
        %709 = vmatprep.subr.mxu0 %v454
        %710 = vmatpush1.xpose.msra.mxu0 %v453
        %711 = vmatprep.subr.mxu0 %v462
        %712 = vmatpush1.xpose.msra.mxu0 %v461
        %713 = vmatprep.subr.mxu0 %v470
        %714 = vmatpush1.xpose.msra.mxu0 %v469
        %715 = vmatprep.subr.mxu0 %v478
        %716 = vmatpush1.xpose.msra.mxu0 %v477
        %717 = vmatprep.subr.mxu0 %v486
        %718 = vmatpush1.xpose.msra.mxu0 %v485
        %719 = vmatprep.subr.mxu0 %v494
        %720 = vmatpush1.xpose.msra.mxu0 %v493
        %721 = vmatprep.subr.mxu0 %v502
        %722 = vmatpush1.xpose.msra.mxu0 %v501
        %723 = vmatprep.mubr.f32.mxu0 %v246
        %724 = vmatmul.mubr.f32.gmra.mrb[0].mxu0 %v245
        %v725 = vpop.f32.mrb[0].mxu0
        %v726 = vadd.f32 %v655, %v725
        %v727 = vpop.f32.mrb[0].mxu0
        %v728 = vadd.f32 %v657, %v727
        %729 = vdwg.mxu0
        %730 = vmatprep.subr.mxu0 %v256
        %731 = vmatpush1.xpose.msra.mxu0 %v255
        %732 = vmatprep.subr.mxu0 %v264
        %733 = vmatpush1.xpose.msra.mxu0 %v263
        %734 = vmatprep.subr.mxu0 %v272
        %735 = vmatpush1.xpose.msra.mxu0 %v271
        %736 = vmatprep.subr.mxu0 %v280
        %737 = vmatpush1.xpose.msra.mxu0 %v279
        %738 = vmatprep.subr.mxu0 %v288
        %739 = vmatpush1.xpose.msra.mxu0 %v287
        %740 = vmatprep.subr.mxu0 %v296
        %741 = vmatpush1.xpose.msra.mxu0 %v295
        %742 = vmatprep.subr.mxu0 %v304
        %743 = vmatpush1.xpose.msra.mxu0 %v303
        %744 = vmatprep.subr.mxu0 %v312
        %745 = vmatpush1.xpose.msra.mxu0 %v311
        %746 = vmatprep.subr.mxu0 %v320
        %747 = vmatpush1.xpose.msra.mxu0 %v319
        %748 = vmatprep.subr.mxu0 %v328
        %749 = vmatpush1.xpose.msra.mxu0 %v327
        %750 = vmatprep.subr.mxu0 %v336
        %751 = vmatpush1.xpose.msra.mxu0 %v335
        %752 = vmatprep.subr.mxu0 %v344
        %753 = vmatpush1.xpose.msra.mxu0 %v343
        %754 = vmatprep.subr.mxu0 %v352
        %755 = vmatpush1.xpose.msra.mxu0 %v351
        %756 = vmatprep.subr.mxu0 %v360
        %757 = vmatpush1.xpose.msra.mxu0 %v359
        %758 = vmatprep.subr.mxu0 %v368
        %759 = vmatpush1.xpose.msra.mxu0 %v367
        %760 = vmatprep.subr.mxu0 %v376
        %761 = vmatpush1.xpose.msra.mxu0 %v375
        %762 = vmatprep.subr.mxu0 %v384
        %763 = vmatpush1.xpose.msra.mxu0 %v383
        %764 = vmatprep.subr.mxu0 %v392
        %765 = vmatpush1.xpose.msra.mxu0 %v391
        %766 = vmatprep.subr.mxu0 %v400
        %767 = vmatpush1.xpose.msra.mxu0 %v399
        %768 = vmatprep.subr.mxu0 %v408
        %769 = vmatpush1.xpose.msra.mxu0 %v407
        %770 = vmatprep.subr.mxu0 %v416
        %771 = vmatpush1.xpose.msra.mxu0 %v415
        %772 = vmatprep.subr.mxu0 %v424
        %773 = vmatpush1.xpose.msra.mxu0 %v423
        %774 = vmatprep.subr.mxu0 %v432
        %775 = vmatpush1.xpose.msra.mxu0 %v431
        %776 = vmatprep.subr.mxu0 %v440
        %777 = vmatpush1.xpose.msra.mxu0 %v439
        %778 = vmatprep.subr.mxu0 %v448
        %779 = vmatpush1.xpose.msra.mxu0 %v447
        %780 = vmatprep.subr.mxu0 %v456
        %781 = vmatpush1.xpose.msra.mxu0 %v455
        %782 = vmatprep.subr.mxu0 %v464
        %783 = vmatpush1.xpose.msra.mxu0 %v463
        %784 = vmatprep.subr.mxu0 %v472
        %785 = vmatpush1.xpose.msra.mxu0 %v471
        %786 = vmatprep.subr.mxu0 %v480
        %787 = vmatpush1.xpose.msra.mxu0 %v479
        %788 = vmatprep.subr.mxu0 %v488
        %789 = vmatpush1.xpose.msra.mxu0 %v487
        %790 = vmatprep.subr.mxu0 %v496
        %791 = vmatpush1.xpose.msra.mxu0 %v495
        %792 = vmatprep.subr.mxu0 %v504
        %793 = vmatpush1.xpose.msra.mxu0 %v503
        %794 = vmatprep.mubr.f32.mxu0 %v248
        %795 = vmatmul.mubr.f32.gmra.mrb[0].mxu0 %v247
        %v796 = vpop.f32.mrb[0].mxu0
        %v797 = vadd.f32 %v726, %v796
        %v798 = vpop.f32.mrb[0].mxu0
        %v799 = vadd.f32 %v728, %v798
        %800 = vdwg.mxu0
        %v801 = vxor.u32 %v797, 2147483648
        %v802 = vxor.u32 %v799, 2147483648
        %v803 = vmul.f32 %v801, 1.442695
        %v804 = vpow.pop %v803
        %v805 = vmul.f32 %v802, 1.442695
        %v806 = vpow.pop %v805
        %v807 = vadd.f32 %v804, 1.0
        %v808 = vadd.f32 %v806, 1.0
        %v809 = vrcp.pop %v807
        %v810 = vmul.f32 1.0, %v809
        %v811 = vrcp.pop %v808
        %v812 = vmul.f32 1.0, %v811
        %v813 = vmul.f32 %v797, %v810
        %v814 = vmul.f32 %v799, %v812
        %v815 = vmul.f32 %v813, 2.0
        %v816 = vmul.f32 %v814, 2.0
        %817 = vst [vmem:[%s237] sm:$0xff] %v815
        %818 = vst [vmem:[%s237 + $0x8] sm:$0xff] %v816
        %s819 = sand.u32 %s102, 1
        %s820 = scalar_lea.sflag [#allocation4], %s819
        %s821 = sand.u32 %s102, 1
        %s822 = smul.addr %s821, 16
        %s823 = scalar_lea.vmem [#allocation8], %s822
        // Predicated region
        $region45: #{tpu_custom_call.1} parent=31 // pred_check
          %p824 = pneg %p112
        $region46: #{tpu_custom_call.1} parent=31 // pred_check_branch
          %826 = sbr.rel (%p824) target = $region48
        $region47: #{tpu_custom_call.1} parent=31 // pred_region
          %s827 = smul.u32 2, %s21
          %s829 = ssub.s32 256, 256
          %830 = vsyncadd %s820, %s829
          %s831 = smul.addr %s827, 128
          %s832 = scalar_lea.hbm %s3, %s831
          %s834 = sshll.u32 %s823, 4
          %s835 = int_to_ptr.vmem [resolvable:$true] %s834
          %837 = dma.vmem_to_hbm [thread:$0]  %s835, 256, %s832, %s820
        $region48: #{tpu_custom_call.1} parent=31 // pred_fallthru
          _
      $region32: #{tpu_custom_call.1} parent=5 // pred_fallthru
        _
      %p838 = scmp.le.s32.totalorder 2, %s16
      // Predicated region
      $region49: #{tpu_custom_call.1} parent=5 // pred_check
        %p839 = pneg %p838
      $region50: #{tpu_custom_call.1} parent=5 // pred_check_branch
        %841 = sbr.rel (%p839) target = $region52
      $region51: #{tpu_custom_call.1} parent=5 // pred_region
        %s842 = ssub.s32 %s16, 2
        // Predicated region
        $region53: #{tpu_custom_call.1} parent=51 // pred_check
          %p843 = pneg %p118
        $region54: #{tpu_custom_call.1} parent=51 // pred_check_branch
          %845 = sbr.rel (%p843) target = $region56
        $region55: #{tpu_custom_call.1} parent=51 // pred_region
          %s846 = sand.u32 %s103, 1
          %s847 = scalar_lea.sflag [#allocation4], %s846
          %s848 = sand.u32 %s103, 1
          %s849 = smul.addr %s848, 16
          %s850 = scalar_lea.vmem [#allocation8], %s849
          %851 = dma.done %s847, 256
        $region56: #{tpu_custom_call.1} parent=51 // pred_fallthru
          _
      $region52: #{tpu_custom_call.1} parent=5 // pred_fallthru
        _
    $region6: #{tpu_custom_call.1} parent=1 // loop_footer
      %s20 = sadd.s32 1, %s16
    $region7: #{tpu_custom_call.1} parent=1 // loop_footer_branch
      %15 = sbr.rel target = $region3
    $region8: #{tpu_custom_call.1} parent=1 // loop_exit
      _
    %852 = vsyncpa [#allocation3], 1
    %s853 = scalar_lea.sflag [#allocation3], 1
    %854 = vsyncpa %s853, 1
    %855 = vsyncpa [#allocation6], 1
    %s856 = scalar_lea.sflag [#allocation6], 1
    %857 = vsyncpa %s856, 1
    %858 = vsyncpa [#allocation4], 1
    %s859 = scalar_lea.sflag [#allocation4], 1
    %860 = vsyncpa %s859, 1

</llo_original>
